<compile_context>
chip_gen: v5e
topology: v5e:2x2
jax: 0.10.0
libtpu: 0.0.40
codegen_flags: <defaults>
</compile_context>

<pallas_src>
import functools

import jax
import jax.numpy as jnp
from jax.experimental import pallas as pl
from jax.experimental.pallas import tpu as pltpu


_VMEM = pl.BlockSpec(memory_space=pltpu.MemorySpace.VMEM)


# ----------------------------------------------------------------------------
# Fused Pallas kernel: num_layers CompGCN convs (+ReLU between) + readout.
# ----------------------------------------------------------------------------
def _fused_gcn_kernel(*refs, num_layers: int, opn: str, readout: str,
                      num_queries: int):
    f32 = jnp.float32
    bf16 = jnp.bfloat16

    if opn == 'sub':
        (ent_ref, rel_ref, adj_ref, brel_ref, w_stack_ref, w_rel_ref,
         consts_ref, diam_ref, readout_ref, out_ref) = refs
        adj = adj_ref[...]              # (N, N) bf16  (edge counts dst<-src)
        brel = brel_ref[...]            # (N, R) bf16  (edge-type counts into dst)
    else:  # 'mult' — nonlinear composition, edge dimension cannot be folded
        (ent_ref, rel_ref, src_oh_ref, rel_oh_ref, dst_oh_t_ref, w_stack_ref,
         w_rel_ref, consts_ref, diam_ref, readout_ref, out_ref) = refs
        src_oh = src_oh_ref[...]        # (E, N) bf16
        rel_oh = rel_oh_ref[...]        # (E, R) bf16
        dst_oh_t = dst_oh_t_ref[...]    # (N, E) bf16

    # Everything below stays resident in VMEM / vregs for all layers.
    ent = ent_ref[...]                  # (N, D) f32
    rel = rel_ref[...]                  # (R, D) f32
    w_stack = w_stack_ref[...]          # (2D, D) bf16 : [0.5*W_edge ; 0.5*W_loop]
    w_rel = w_rel_ref[...]              # (D, D)  bf16
    consts = consts_ref[...]            # (2, D)  f32 : [loop_rel ; bias]
    diam = diam_ref[...]                # (N, 1)  f32

    # Hoisted (1,D)->(N,D) broadcasts (shared across all unrolled layers).
    loop_rel_n = jnp.broadcast_to(consts[0:1, :], ent.shape)
    bias_n = jnp.broadcast_to(consts[1:2, :], ent.shape)

    for layer_i in range(num_layers):   # shared weights, statically unrolled
        ent_b = ent.astype(bf16)
        rel_b = rel.astype(bf16)

        if opn == 'sub':
            # dst^T(src_oh@ent - rel_oh@rel) == (dst^T src_oh)@ent - (dst^T rel_oh)@rel
            agg_nodes = (jnp.dot(adj, ent_b, preferred_element_type=f32)
                         - jnp.dot(brel, rel_b, preferred_element_type=f32))   # (N, D)
            loop_comp = ent - loop_rel_n
        else:  # 'mult'
            src_e = jnp.dot(src_oh, ent_b, preferred_element_type=f32)         # (E, D)
            rel_e = jnp.dot(rel_oh, rel_b, preferred_element_type=f32)         # (E, D)
            comp = (src_e * rel_e).astype(bf16)
            agg_nodes = jnp.dot(dst_oh_t, comp, preferred_element_type=f32)    # (N, D)
            loop_comp = ent * loop_rel_n

        # Fused edge + self-loop transform: one (N,2D)x(2D,D) matmul; the 0.5
        # scales are baked into w_stack, so this directly yields
        # 0.5*agg@W_edge + 0.5*loop_comp@W_loop.
        fused_in = jnp.concatenate([agg_nodes, loop_comp],
                                   axis=-1).astype(bf16)                        # (N, 2D)
        msg = jnp.dot(fused_in, w_stack, preferred_element_type=f32)            # (N, D)

        new_ent = jnp.tanh(msg + bias_n)                                        # f32 epilogue

        # ent_mask semantics: convs (= layer_i+1) > diameter  ->  freeze entity.
        frozen = float(layer_i + 1) > diam                                      # (N, 1) bool
        ent = jnp.where(frozen, ent, new_ent)

        if layer_i < num_layers - 1:
            # nn.ReLU() between shared-weight convs, applied to the whole
            # ent_embed (matches the Module's [conv, ReLU, ..., conv] list).
            ent = jnp.maximum(ent, 0.0)
            # Relation update (skipped on the final layer: never read after).
            rel = jnp.dot(rel_b, w_rel, preferred_element_type=f32)

    # ---------------- readout (fused) ----------------
    if readout in ('sum', 'TM'):
        # sum: scatter_add == batch_one_hot^T @ embs   (readout_ref is (B, N))
        # TM : embs[target_idx] == target_one_hot @ embs
        out_ref[...] = jnp.dot(readout_ref[...], ent, preferred_element_type=f32)
    elif readout == 'max':
        # scatter_max without a rank-3 (B,N,D) broadcast; build (B, D) as a
        # value and do ONE lane-dense store (no B partial row stores).
        batch_oh_nb = readout_ref[...]                                           # (N, B) f32
        rows = []
        for b in range(num_queries):
            col = batch_oh_nb[:, b:b + 1]                                        # (N, 1)
            masked = jnp.where(col > 0.0, ent, -jnp.inf)
            mx = jnp.max(masked, axis=0, keepdims=True)                          # (1, D)
            cnt = jnp.sum(col, axis=0, keepdims=True)                            # (1, 1)
            rows.append(jnp.where(cnt > 0.0, mx, jnp.zeros_like(mx)))            # empty -> 0
        out_ref[...] = jnp.concatenate(rows, axis=0)                             # (B, D)
    else:
        raise ValueError(readout)


# ----------------------------------------------------------------------------
# Wrapper
# ----------------------------------------------------------------------------
def gcn_model_forward(ent_embed, rel_embed, edge_index, edge_type, diameters,
                      batch_idx, target_idx, params, *,
                      num_layers, num_queries, opn='sub', readout='sum'):
    """Mirrors GCNModel.forward: num_layers shared-weight CompGCN convs with
    ReLU between them, then the chosen readout — all inside ONE pallas_call."""
    assert opn in ('sub', 'mult'), f"opn={opn!r} not supported (see TODO for 'corr')"
    assert readout in ('sum', 'max', 'TM'), readout

    n_ent, embed_dim = ent_embed.shape
    n_rel = rel_embed.shape[0]

    # Stacked, pre-scaled conv weight (2D, D): one K=2D matmul computes
    # 0.5*agg@W_edge + 0.5*loop@W_loop.  Cast to bf16 once, outside the kernel.
    w_stack = jnp.concatenate([0.5 * params['w_edge'], 0.5 * params['w_loop']],
                              axis=0).astype(jnp.bfloat16)                       # (2D, D)
    w_rel = params['w_rel'].astype(jnp.bfloat16)                                 # (D, D)
    consts = jnp.concatenate([params['loop_rel'], params['bias']], axis=0)       # (2, D) f32
    diam_f = diameters.astype(jnp.float32).reshape(n_ent, 1)

    # Readout matrices, generated already in the orientation the kernel needs.
    if readout == 'sum':
        readout_mat = jax.nn.one_hot(batch_idx, num_queries, axis=0,
                                     dtype=jnp.float32)                          # (B, N)
    elif readout == 'TM':
        readout_mat = jax.nn.one_hot(target_idx, n_ent, dtype=jnp.float32)       # (B, N)
    else:  # 'max'
        readout_mat = jax.nn.one_hot(batch_idx, num_queries,
                                     dtype=jnp.float32)                          # (N, B)

    if opn == 'sub':
        # Edge dimension eliminated outside the kernel (graph structure only):
        #   adj[n, m]  = #edges m -> n            (N, N)
        #   brel[n, r] = #edges of type r into n  (N, R)
        # Integer counts are exact in bf16 up to 256.
        adj = jnp.zeros((n_ent, n_ent), jnp.float32
                        ).at[edge_index[1], edge_index[0]].add(1.0)
        brel = jnp.zeros((n_ent, n_rel), jnp.float32
                         ).at[edge_index[1], edge_type].add(1.0)
        graph_args = (adj.astype(jnp.bfloat16), brel.astype(jnp.bfloat16))
    else:  # 'mult' — keep the edge path; dst one-hot built pre-transposed.
        src_oh = jax.nn.one_hot(edge_index[0], n_ent, dtype=jnp.bfloat16)        # (E, N)
        rel_oh = jax.nn.one_hot(edge_type, n_rel, dtype=jnp.bfloat16)            # (E, R)
        dst_oh_t = jax.nn.one_hot(edge_index[1], n_ent, axis=0,
                                  dtype=jnp.bfloat16)                            # (N, E)
        graph_args = (src_oh, rel_oh, dst_oh_t)

    kernel = functools.partial(_fused_gcn_kernel, num_layers=num_layers,
                               opn=opn, readout=readout,
                               num_queries=num_queries)

    args = (ent_embed, rel_embed) + graph_args + (w_stack, w_rel, consts,
                                                  diam_f, readout_mat)

    out = pl.pallas_call(
        kernel,
        out_shape=jax.ShapeDtypeStruct((num_queries, embed_dim), jnp.float32),
        in_specs=[_VMEM] * len(args),
        out_specs=_VMEM,
    )(*args)
    return out


def init_params(key, embed_dim, use_bias=True):
    k1, k2, k3, k4 = jax.random.split(key, 4)
    scale = 1.0 / jnp.sqrt(embed_dim)
    return {
        'w_edge': jax.random.normal(k1, (embed_dim, embed_dim), jnp.float32) * scale,
        'w_loop': jax.random.normal(k2, (embed_dim, embed_dim), jnp.float32) * scale,
        'w_rel':  jax.random.normal(k3, (embed_dim, embed_dim), jnp.float32) * scale,
        'loop_rel': jax.random.normal(k4, (1, embed_dim), jnp.float32) * 0.1,
        'bias': jnp.zeros((1, embed_dim), jnp.float32),   # zeros also when use_bias=False
    }


# ----------------------------------------------------------------------------
# Demo
# ----------------------------------------------------------------------------
if __name__ == "__main__":
    EMBED_DIM = 128      # lane-aligned hidden size
    NUM_LAYERS = 3
    N_ENT = 16           # entities (query-graph nodes)
    N_REL = 8            # relation types
    N_EDGE = 24          # edges
    N_QUERY = 4          # queries in the batch

    key = jax.random.PRNGKey(0)
    k_ent, k_rel, k_src, k_dst, k_et, k_dia, k_par = jax.random.split(key, 7)

    ent_embed = jax.random.normal(k_ent, (N_ENT, EMBED_DIM), jnp.float32)
    rel_embed = jax.random.normal(k_rel, (N_REL, EMBED_DIM), jnp.float32)
    edge_index = jnp.stack([
        jax.random.randint(k_src, (N_EDGE,), 0, N_ENT),
        jax.random.randint(k_dst, (N_EDGE,), 0, N_ENT),
    ], axis=0)                                                     # (2, E)
    edge_type = jax.random.randint(k_et, (N_EDGE,), 0, N_REL)      # (E,)
    diameters = jax.random.randint(k_dia, (N_ENT,), 1, 4)          # q_diameters
    batch_idx = jnp.repeat(jnp.arange(N_QUERY), N_ENT // N_QUERY)  # (N,)
    target_idx = jnp.arange(N_QUERY) * (N_ENT // N_QUERY)          # (B,)

    params = init_params(k_par, EMBED_DIM, use_bias=True)

    # opn='sub' (edge-free fast path) over all readouts.
    for ro in ('sum', 'max', 'TM'):
        out = gcn_model_forward(ent_embed, rel_embed, edge_index, edge_type,
                                diameters, batch_idx, target_idx, params,
                                num_layers=NUM_LAYERS, num_queries=N_QUERY,
                                opn='sub', readout=ro)
        out = jax.block_until_ready(out)
        assert out.shape == (N_QUERY, EMBED_DIM), (ro, out.shape)
        assert jnp.all(jnp.isfinite(out)), ro

    # opn='mult' (edge path) sanity run.
    out = gcn_model_forward(ent_embed, rel_embed, edge_index, edge_type,
                            diameters, batch_idx, target_idx, params,
                            num_layers=NUM_LAYERS, num_queries=N_QUERY,
                            opn='mult', readout='sum')
    out = jax.block_until_ready(out)
    assert out.shape == (N_QUERY, EMBED_DIM)
    assert jnp.all(jnp.isfinite(out))

    print("KERNEL_OK")
</pallas_src>

<mosaic_0001>
module attributes {stable_mosaic.version = 11 : i64} {
  func.func @_fused_gcn_kernel(%arg0: memref<16x128xf32, #tpu.memory_space<vmem>>, %arg1: memref<8x128xf32, #tpu.memory_space<vmem>>, %arg2: memref<16x16xbf16, #tpu.memory_space<vmem>>, %arg3: memref<16x8xbf16, #tpu.memory_space<vmem>>, %arg4: memref<256x128xbf16, #tpu.memory_space<vmem>>, %arg5: memref<128x128xbf16, #tpu.memory_space<vmem>>, %arg6: memref<2x128xf32, #tpu.memory_space<vmem>>, %arg7: memref<16x1xf32, #tpu.memory_space<vmem>>, %arg8: memref<4x16xf32, #tpu.memory_space<vmem>>, %arg9: memref<4x128xf32, #tpu.memory_space<vmem>>) attributes {dimension_semantics = [], scalar_prefetch = 0 : i64, scratch_operands = 0 : i64, tpu.core_type = #tpu.core_type<tc>} {
    %c0 = arith.constant 0 : index
    %c0_0 = arith.constant 0 : index
    %0 = vector.load %arg2[%c0, %c0_0] : memref<16x16xbf16, #tpu.memory_space<vmem>>, vector<16x16xbf16>
    %c0_1 = arith.constant 0 : index
    %c0_2 = arith.constant 0 : index
    %1 = vector.load %arg3[%c0_1, %c0_2] : memref<16x8xbf16, #tpu.memory_space<vmem>>, vector<16x8xbf16>
    %c0_3 = arith.constant 0 : index
    %c0_4 = arith.constant 0 : index
    %2 = vector.load %arg0[%c0_3, %c0_4] : memref<16x128xf32, #tpu.memory_space<vmem>>, vector<16x128xf32>
    %c0_5 = arith.constant 0 : index
    %c0_6 = arith.constant 0 : index
    %3 = vector.load %arg1[%c0_5, %c0_6] : memref<8x128xf32, #tpu.memory_space<vmem>>, vector<8x128xf32>
    %c0_7 = arith.constant 0 : index
    %c0_8 = arith.constant 0 : index
    %4 = vector.load %arg4[%c0_7, %c0_8] : memref<256x128xbf16, #tpu.memory_space<vmem>>, vector<256x128xbf16>
    %c0_9 = arith.constant 0 : index
    %c0_10 = arith.constant 0 : index
    %5 = vector.load %arg5[%c0_9, %c0_10] : memref<128x128xbf16, #tpu.memory_space<vmem>>, vector<128x128xbf16>
    %c0_11 = arith.constant 0 : index
    %c0_12 = arith.constant 0 : index
    %6 = vector.load %arg6[%c0_11, %c0_12] : memref<2x128xf32, #tpu.memory_space<vmem>>, vector<2x128xf32>
    %c0_13 = arith.constant 0 : index
    %c0_14 = arith.constant 0 : index
    %7 = vector.load %arg7[%c0_13, %c0_14] : memref<16x1xf32, #tpu.memory_space<vmem>>, vector<16x1xf32>
    %8 = vector.extract_strided_slice %6 {offsets = [0, 0], sizes = [1, 128], strides = [1, 1]} : vector<2x128xf32> to vector<1x128xf32>
    %9 = vector.shape_cast %8 : vector<1x128xf32> to vector<1x128xf32>
    %10 = vector.broadcast %9 : vector<1x128xf32> to vector<16x128xf32>
    %11 = vector.extract_strided_slice %6 {offsets = [1, 0], sizes = [1, 128], strides = [1, 1]} : vector<2x128xf32> to vector<1x128xf32>
    %12 = vector.shape_cast %11 : vector<1x128xf32> to vector<1x128xf32>
    %13 = vector.broadcast %12 : vector<1x128xf32> to vector<16x128xf32>
    %14 = arith.truncf %2 : vector<16x128xf32> to vector<16x128xbf16>
    %15 = arith.truncf %3 : vector<8x128xf32> to vector<8x128xbf16>
    %cst = arith.constant dense<0.000000e+00> : vector<16x128xf32>
    %16 = tpu.matmul %0, %14, %cst {dimension_numbers = #tpu.dot_dimension_numbers<[1], [0], [0], [1], [0, 0, 1, 1], [], []>} : vector<16x16xbf16>, vector<16x128xbf16>, vector<16x128xf32> -> vector<16x128xf32>
    %cst_15 = arith.constant dense<0.000000e+00> : vector<16x128xf32>
    %17 = tpu.matmul %1, %15, %cst_15 {dimension_numbers = #tpu.dot_dimension_numbers<[1], [0], [0], [1], [0, 0, 1, 1], [], []>} : vector<16x8xbf16>, vector<8x128xbf16>, vector<16x128xf32> -> vector<16x128xf32>
    %18 = arith.subf %16, %17 : vector<16x128xf32>
    %19 = arith.subf %2, %10 : vector<16x128xf32>
    %20 = tpu.concatenate %18, %19 in 1 : vector<16x128xf32>, vector<16x128xf32> -> vector<16x256xf32>
    %21 = arith.truncf %20 : vector<16x256xf32> to vector<16x256xbf16>
    %cst_16 = arith.constant dense<0.000000e+00> : vector<16x128xf32>
    %22 = tpu.matmul %21, %4, %cst_16 {dimension_numbers = #tpu.dot_dimension_numbers<[1], [0], [0], [1], [0, 0, 1, 1], [], []>} : vector<16x256xbf16>, vector<256x128xbf16>, vector<16x128xf32> -> vector<16x128xf32>
    %23 = arith.addf %22, %13 : vector<16x128xf32>
    %24 = math.tanh %23 : vector<16x128xf32>
    %cst_17 = arith.constant 1.000000e+00 : f32
    %25 = vector.broadcast %cst_17 : f32 to vector<16x1xf32>
    %26 = arith.cmpf olt, %7, %25 : vector<16x1xf32>
    %27 = vector.shape_cast %26 : vector<16x1xi1> to vector<16x1xi1>
    %28 = vector.broadcast %27 : vector<16x1xi1> to vector<16x128xi1>
    %29 = arith.select %28, %2, %24 : vector<16x128xi1>, vector<16x128xf32>
    %cst_18 = arith.constant 0.000000e+00 : f32
    %30 = vector.broadcast %cst_18 : f32 to vector<16x128xf32>
    %31 = arith.maximumf %29, %30 : vector<16x128xf32>
    %cst_19 = arith.constant dense<0.000000e+00> : vector<8x128xf32>
    %32 = tpu.matmul %15, %5, %cst_19 {dimension_numbers = #tpu.dot_dimension_numbers<[1], [0], [0], [1], [0, 0, 1, 1], [], []>} : vector<8x128xbf16>, vector<128x128xbf16>, vector<8x128xf32> -> vector<8x128xf32>
    %33 = arith.truncf %31 : vector<16x128xf32> to vector<16x128xbf16>
    %34 = arith.truncf %32 : vector<8x128xf32> to vector<8x128xbf16>
    %cst_20 = arith.constant dense<0.000000e+00> : vector<16x128xf32>
    %35 = tpu.matmul %0, %33, %cst_20 {dimension_numbers = #tpu.dot_dimension_numbers<[1], [0], [0], [1], [0, 0, 1, 1], [], []>} : vector<16x16xbf16>, vector<16x128xbf16>, vector<16x128xf32> -> vector<16x128xf32>
    %cst_21 = arith.constant dense<0.000000e+00> : vector<16x128xf32>
    %36 = tpu.matmul %1, %34, %cst_21 {dimension_numbers = #tpu.dot_dimension_numbers<[1], [0], [0], [1], [0, 0, 1, 1], [], []>} : vector<16x8xbf16>, vector<8x128xbf16>, vector<16x128xf32> -> vector<16x128xf32>
    %37 = arith.subf %35, %36 : vector<16x128xf32>
    %38 = arith.subf %31, %10 : vector<16x128xf32>
    %39 = tpu.concatenate %37, %38 in 1 : vector<16x128xf32>, vector<16x128xf32> -> vector<16x256xf32>
    %40 = arith.truncf %39 : vector<16x256xf32> to vector<16x256xbf16>
    %cst_22 = arith.constant dense<0.000000e+00> : vector<16x128xf32>
    %41 = tpu.matmul %40, %4, %cst_22 {dimension_numbers = #tpu.dot_dimension_numbers<[1], [0], [0], [1], [0, 0, 1, 1], [], []>} : vector<16x256xbf16>, vector<256x128xbf16>, vector<16x128xf32> -> vector<16x128xf32>
    %42 = arith.addf %41, %13 : vector<16x128xf32>
    %43 = math.tanh %42 : vector<16x128xf32>
    %cst_23 = arith.constant 2.000000e+00 : f32
    %44 = vector.broadcast %cst_23 : f32 to vector<16x1xf32>
    %45 = arith.cmpf olt, %7, %44 : vector<16x1xf32>
    %46 = vector.shape_cast %45 : vector<16x1xi1> to vector<16x1xi1>
    %47 = vector.broadcast %46 : vector<16x1xi1> to vector<16x128xi1>
    %48 = arith.select %47, %31, %43 : vector<16x128xi1>, vector<16x128xf32>
    %cst_24 = arith.constant 0.000000e+00 : f32
    %49 = vector.broadcast %cst_24 : f32 to vector<16x128xf32>
    %50 = arith.maximumf %48, %49 : vector<16x128xf32>
    %cst_25 = arith.constant dense<0.000000e+00> : vector<8x128xf32>
    %51 = tpu.matmul %34, %5, %cst_25 {dimension_numbers = #tpu.dot_dimension_numbers<[1], [0], [0], [1], [0, 0, 1, 1], [], []>} : vector<8x128xbf16>, vector<128x128xbf16>, vector<8x128xf32> -> vector<8x128xf32>
    %52 = arith.truncf %50 : vector<16x128xf32> to vector<16x128xbf16>
    %53 = arith.truncf %51 : vector<8x128xf32> to vector<8x128xbf16>
    %cst_26 = arith.constant dense<0.000000e+00> : vector<16x128xf32>
    %54 = tpu.matmul %0, %52, %cst_26 {dimension_numbers = #tpu.dot_dimension_numbers<[1], [0], [0], [1], [0, 0, 1, 1], [], []>} : vector<16x16xbf16>, vector<16x128xbf16>, vector<16x128xf32> -> vector<16x128xf32>
    %cst_27 = arith.constant dense<0.000000e+00> : vector<16x128xf32>
    %55 = tpu.matmul %1, %53, %cst_27 {dimension_numbers = #tpu.dot_dimension_numbers<[1], [0], [0], [1], [0, 0, 1, 1], [], []>} : vector<16x8xbf16>, vector<8x128xbf16>, vector<16x128xf32> -> vector<16x128xf32>
    %56 = arith.subf %54, %55 : vector<16x128xf32>
    %57 = arith.subf %50, %10 : vector<16x128xf32>
    %58 = tpu.concatenate %56, %57 in 1 : vector<16x128xf32>, vector<16x128xf32> -> vector<16x256xf32>
    %59 = arith.truncf %58 : vector<16x256xf32> to vector<16x256xbf16>
    %cst_28 = arith.constant dense<0.000000e+00> : vector<16x128xf32>
    %60 = tpu.matmul %59, %4, %cst_28 {dimension_numbers = #tpu.dot_dimension_numbers<[1], [0], [0], [1], [0, 0, 1, 1], [], []>} : vector<16x256xbf16>, vector<256x128xbf16>, vector<16x128xf32> -> vector<16x128xf32>
    %61 = arith.addf %60, %13 : vector<16x128xf32>
    %62 = math.tanh %61 : vector<16x128xf32>
    %cst_29 = arith.constant 3.000000e+00 : f32
    %63 = vector.broadcast %cst_29 : f32 to vector<16x1xf32>
    %64 = arith.cmpf olt, %7, %63 : vector<16x1xf32>
    %65 = vector.shape_cast %64 : vector<16x1xi1> to vector<16x1xi1>
    %66 = vector.broadcast %65 : vector<16x1xi1> to vector<16x128xi1>
    %67 = arith.select %66, %50, %62 : vector<16x128xi1>, vector<16x128xf32>
    %c0_30 = arith.constant 0 : index
    %c0_31 = arith.constant 0 : index
    %68 = vector.load %arg8[%c0_30, %c0_31] : memref<4x16xf32, #tpu.memory_space<vmem>>, vector<4x16xf32>
    %cst_32 = arith.constant dense<0.000000e+00> : vector<4x128xf32>
    %69 = tpu.matmul %68, %67, %cst_32 {dimension_numbers = #tpu.dot_dimension_numbers<[1], [0], [0], [1], [0, 0, 1, 1], [], []>} : vector<4x16xf32>, vector<16x128xf32>, vector<4x128xf32> -> vector<4x128xf32>
    %c0_33 = arith.constant 0 : index
    %c0_34 = arith.constant 0 : index
    %70 = vector.load %arg9[%c0_33, %c0_34] : memref<4x128xf32, #tpu.memory_space<vmem>>, vector<4x128xf32>
    tpu.vector_store %arg9[%c0_33, %c0_34], %69 {strides = array<i32>} : memref<4x128xf32, #tpu.memory_space<vmem>>, vector<4x128xf32>,
    return
  }
}

</mosaic_0001>

<llo_original>
// kernel: tpu_custom_call.1
$region0: #{tpu_custom_call.1}
  #allocation0 [shape = 'u32[]', space=smem, size = 0x4, offset = 0x4, fixed_abs, tag = 'smem constant byte address 0x4 - core index']
  #allocation1 [shape = 'u32[72,128]{1,0:T(1,128)}', space=vmem, size = 0x9000, scoped, tag = 'internal scratch']
  %s0 = inlined_call_operand.vmem [shape: f32[16,128], index: 0, kind: input, shape index: {}]
  %s1 = inlined_call_operand.vmem [shape: f32[8,128], index: 1, kind: input, shape index: {}]
  %s2 = inlined_call_operand.hbm [shape: bf16[16,16], index: 2, kind: input, shape index: {}]
  %s3 = inlined_call_operand.vmem [shape: bf16[16,8], index: 3, kind: input, shape index: {}]
  %s4 = inlined_call_operand.hbm [shape: bf16[256,128], index: 4, kind: input, shape index: {}]
  %s5 = inlined_call_operand.hbm [shape: bf16[128,128], index: 5, kind: input, shape index: {}]
  %s6 = inlined_call_operand.vmem [shape: f32[2,128], index: 6, kind: input, shape index: {}]
  %s7 = inlined_call_operand.vmem [shape: f32[16,1], index: 7, kind: input, shape index: {}]
  %s8 = inlined_call_operand.vmem [shape: f32[4,16], index: 8, kind: input, shape index: {}]
  %s9 = inlined_call_operand.hbm [shape: f32[4,128], index: 9, kind: output, shape index: {}]
  %s10 = sld [smem:[#allocation0]]
  $region58: #{tpu_custom_call.1} parent=0
    _
  %s12 = ssub.s32 1, %s10
  %s13 = scalar_select 0, %s12, %s10
  $region1: #{tpu_custom_call.1} parent=0
    #allocation2 [shape = 'u8[4096]{0}', space=vmem, size = 0x1000, scoped, tag = 'input window, operand 2, single buffered']
    #allocation3 [shape = 's32[1]{0}', space=sflag, size = 0x4, scoped, tag = 'scoped memory for tpu_custom_call.1']
    #allocation4 [shape = 's32[1]{0}', space=sflag, size = 0x4, scoped, tag = 'scoped memory for tpu_custom_call.1']
    #allocation5 [shape = 'u8[65536]{0}', space=vmem, size = 0x10000, scoped, tag = 'input window, operand 4, single buffered']
    #allocation6 [shape = 's32[1]{0}', space=sflag, size = 0x4, scoped, tag = 'scoped memory for tpu_custom_call.1']
    #allocation7 [shape = 'u8[32768]{0}', space=vmem, size = 0x8000, scoped, tag = 'input window, operand 5, single buffered']
    #allocation8 [shape = 'u8[2048]{0}', space=vmem, size = 0x800, scoped, tag = 'output window, operand 0, single buffered']
    %14 = vsyncpa [#allocation3], 0
    %15 = vsyncpa [#allocation6], 0
    %16 = vsyncpa [#allocation4], 0
    // Predicated region
    $region2: #{tpu_custom_call.1} parent=1 // pred_check
      _
    $region3: #{tpu_custom_call.1} parent=1 // pred_check_branch
      %18 = sbr.rel (0) target = $region5
    $region4: #{tpu_custom_call.1} parent=1 // pred_region
      _
    $region5: #{tpu_custom_call.1} parent=1 // pred_fallthru
      _
    // Predicated region
    $region6: #{tpu_custom_call.1} parent=1 // pred_check
      _
    $region7: #{tpu_custom_call.1} parent=1 // pred_check_branch
      %20 = sbr.rel (0) target = $region9
    $region8: #{tpu_custom_call.1} parent=1 // pred_region
      _
    $region9: #{tpu_custom_call.1} parent=1 // pred_fallthru
      _
    // Predicated region
    $region10: #{tpu_custom_call.1} parent=1 // pred_check
      _
    $region11: #{tpu_custom_call.1} parent=1 // pred_check_branch
      %22 = sbr.rel (0) target = $region13
    $region12: #{tpu_custom_call.1} parent=1 // pred_region
      %24 = vsyncadd [#allocation3], 0
      %s25 = sshll.u32 %s2, 4
      %s26 = int_to_ptr.hbm [resolvable:$true] %s25
      %s27 = sshll.u32 [#allocation2], 4
      %s28 = int_to_ptr.vmem [resolvable:$true] %s27
      %33 = dma.hbm_to_vmem [thread:$0]  %s26, 128, %s28, [#allocation3], 64, 64, 4
    $region13: #{tpu_custom_call.1} parent=1 // pred_fallthru
      _
    // Predicated region
    $region14: #{tpu_custom_call.1} parent=1 // pred_check
      _
    $region15: #{tpu_custom_call.1} parent=1 // pred_check_branch
      %35 = sbr.rel (0) target = $region17
    $region16: #{tpu_custom_call.1} parent=1 // pred_region
      _
    $region17: #{tpu_custom_call.1} parent=1 // pred_fallthru
      _
    // Predicated region
    $region18: #{tpu_custom_call.1} parent=1 // pred_check
      _
    $region19: #{tpu_custom_call.1} parent=1 // pred_check_branch
      %37 = sbr.rel (0) target = $region21
    $region20: #{tpu_custom_call.1} parent=1 // pred_region
      %39 = vsyncadd [#allocation6], 0
      %s40 = sshll.u32 %s4, 4
      %s41 = int_to_ptr.hbm [resolvable:$true] %s40
      %s42 = sshll.u32 [#allocation5], 4
      %s43 = int_to_ptr.vmem [resolvable:$true] %s42
      %48 = dma.hbm_to_vmem [thread:$0]  %s41, 2048, %s43, [#allocation6], 64, 64, 4
    $region21: #{tpu_custom_call.1} parent=1 // pred_fallthru
      _
    // Predicated region
    $region22: #{tpu_custom_call.1} parent=1 // pred_check
      _
    $region23: #{tpu_custom_call.1} parent=1 // pred_check_branch
      %50 = sbr.rel (0) target = $region25
    $region24: #{tpu_custom_call.1} parent=1 // pred_region
      %52 = vsyncadd [#allocation6], 0
      %s53 = sshll.u32 %s5, 4
      %s54 = int_to_ptr.hbm [resolvable:$true] %s53
      %s55 = sshll.u32 [#allocation7], 4
      %s56 = int_to_ptr.vmem [resolvable:$true] %s55
      %61 = dma.hbm_to_vmem [thread:$0]  %s54, 1024, %s56, [#allocation6], 64, 64, 4
    $region25: #{tpu_custom_call.1} parent=1 // pred_fallthru
      _
    // Predicated region
    $region26: #{tpu_custom_call.1} parent=1 // pred_check
      _
    $region27: #{tpu_custom_call.1} parent=1 // pred_check_branch
      %63 = sbr.rel (0) target = $region29
    $region28: #{tpu_custom_call.1} parent=1 // pred_region
      _
    $region29: #{tpu_custom_call.1} parent=1 // pred_fallthru
      _
    // Predicated region
    $region30: #{tpu_custom_call.1} parent=1 // pred_check
      _
    $region31: #{tpu_custom_call.1} parent=1 // pred_check_branch
      %65 = sbr.rel (0) target = $region33
    $region32: #{tpu_custom_call.1} parent=1 // pred_region
      _
    $region33: #{tpu_custom_call.1} parent=1 // pred_fallthru
      _
    // Predicated region
    $region34: #{tpu_custom_call.1} parent=1 // pred_check
      _
    $region35: #{tpu_custom_call.1} parent=1 // pred_check_branch
      %67 = sbr.rel (0) target = $region37
    $region36: #{tpu_custom_call.1} parent=1 // pred_region
      _
    $region37: #{tpu_custom_call.1} parent=1 // pred_fallthru
      _
    // Predicated region
    $region38: #{tpu_custom_call.1} parent=1 // pred_check
      _
    $region39: #{tpu_custom_call.1} parent=1 // pred_check_branch
      %69 = sbr.rel (0) target = $region41
    $region40: #{tpu_custom_call.1} parent=1 // pred_region
      %71 = dma.done [#allocation3], 128
    $region41: #{tpu_custom_call.1} parent=1 // pred_fallthru
      _
    // Predicated region
    $region42: #{tpu_custom_call.1} parent=1 // pred_check
      _
    $region43: #{tpu_custom_call.1} parent=1 // pred_check_branch
      %73 = sbr.rel (0) target = $region45
    $region44: #{tpu_custom_call.1} parent=1 // pred_region
      %75 = dma.done [#allocation6], 2048
    $region45: #{tpu_custom_call.1} parent=1 // pred_fallthru
      _
    // Predicated region
    $region46: #{tpu_custom_call.1} parent=1 // pred_check
      _
    $region47: #{tpu_custom_call.1} parent=1 // pred_check_branch
      %77 = sbr.rel (0) target = $region49
    $region48: #{tpu_custom_call.1} parent=1 // pred_region
      %79 = dma.done [#allocation6], 1024
    $region49: #{tpu_custom_call.1} parent=1 // pred_fallthru
      _
    %v81 = vld [vmem:[#allocation2] sm:$0xf]
    %v82 = vld [vmem:[#allocation2 + $0x4] sm:$0xf]
    %v83 = vld [vmem:[%s3] sm:$0xf]
    %v84 = vld [vmem:[%s3 + $0x4] sm:$0xf]
    %v85 = vld [vmem:[%s0] sm:$0xff]
    %v86 = vld [vmem:[%s0 + $0x8] sm:$0xff]
    %v87 = vld [vmem:[%s1] sm:$0xff]
    %v88 = vld [vmem:[#allocation5] sm:$0xf]
    %v89 = vld [vmem:[#allocation5 + $0x4] sm:$0xf]
    %v90 = vld [vmem:[#allocation5 + $0x8] sm:$0xf]
    %v91 = vld [vmem:[#allocation5 + $0xc] sm:$0xf]
    %v92 = vld [vmem:[#allocation5 + $0x10] sm:$0xf]
    %v93 = vld [vmem:[#allocation5 + $0x14] sm:$0xf]
    %v94 = vld [vmem:[#allocation5 + $0x18] sm:$0xf]
    %v95 = vld [vmem:[#allocation5 + $0x1c] sm:$0xf]
    %v96 = vld [vmem:[#allocation5 + $0x20] sm:$0xf]
    %v97 = vld [vmem:[#allocation5 + $0x24] sm:$0xf]
    %v98 = vld [vmem:[#allocation5 + $0x28] sm:$0xf]
    %v99 = vld [vmem:[#allocation5 + $0x2c] sm:$0xf]
    %v100 = vld [vmem:[#allocation5 + $0x30] sm:$0xf]
    %v101 = vld [vmem:[#allocation5 + $0x34] sm:$0xf]
    %v102 = vld [vmem:[#allocation5 + $0x38] sm:$0xf]
    %v103 = vld [vmem:[#allocation5 + $0x3c] sm:$0xf]
    %v104 = vld [vmem:[#allocation5 + $0x40] sm:$0xf]
    %v105 = vld [vmem:[#allocation5 + $0x44] sm:$0xf]
    %v106 = vld [vmem:[#allocation5 + $0x48] sm:$0xf]
    %v107 = vld [vmem:[#allocation5 + $0x4c] sm:$0xf]
    %v108 = vld [vmem:[#allocation5 + $0x50] sm:$0xf]
    %v109 = vld [vmem:[#allocation5 + $0x54] sm:$0xf]
    %v110 = vld [vmem:[#allocation5 + $0x58] sm:$0xf]
    %v111 = vld [vmem:[#allocation5 + $0x5c] sm:$0xf]
    %v112 = vld [vmem:[#allocation5 + $0x60] sm:$0xf]
    %v113 = vld [vmem:[#allocation5 + $0x64] sm:$0xf]
    %v114 = vld [vmem:[#allocation5 + $0x68] sm:$0xf]
    %v115 = vld [vmem:[#allocation5 + $0x6c] sm:$0xf]
    %v116 = vld [vmem:[#allocation5 + $0x70] sm:$0xf]
    %v117 = vld [vmem:[#allocation5 + $0x74] sm:$0xf]
    %v118 = vld [vmem:[#allocation5 + $0x78] sm:$0xf]
    %v119 = vld [vmem:[#allocation5 + $0x7c] sm:$0xf]
    %v120 = vld [vmem:[#allocation7] sm:$0xf]
    %v121 = vld [vmem:[#allocation7 + $0x4] sm:$0xf]
    %v122 = vld [vmem:[#allocation7 + $0x8] sm:$0xf]
    %v123 = vld [vmem:[#allocation7 + $0xc] sm:$0xf]
    %v124 = vld [vmem:[#allocation7 + $0x10] sm:$0xf]
    %v125 = vld [vmem:[#allocation7 + $0x14] sm:$0xf]
    %v126 = vld [vmem:[#allocation7 + $0x18] sm:$0xf]
    %v127 = vld [vmem:[#allocation7 + $0x1c] sm:$0xf]
    %v128 = vld [vmem:[#allocation7 + $0x20] sm:$0xf]
    %v129 = vld [vmem:[#allocation7 + $0x24] sm:$0xf]
    %v130 = vld [vmem:[#allocation7 + $0x28] sm:$0xf]
    %v131 = vld [vmem:[#allocation7 + $0x2c] sm:$0xf]
    %v132 = vld [vmem:[#allocation7 + $0x30] sm:$0xf]
    %v133 = vld [vmem:[#allocation7 + $0x34] sm:$0xf]
    %v134 = vld [vmem:[#allocation7 + $0x38] sm:$0xf]
    %v135 = vld [vmem:[#allocation7 + $0x3c] sm:$0xf]
    %v136 = vld [vmem:[%s6] sm:$0x3]
    %v137 = vld [vmem:[%s7] sm:$0xff]
    %v138 = vld [vmem:[%s7 + $0x8] sm:$0xff]
    %v139 = vperm.slane %v136, 0
    %v140 = vperm.slane %v136, 1
    %v141 = vpack.c.bf16 %v86, %v85
    %v142 = vpack.c.bf16 %v87, %v87
    %v145 = vunpack.c.l.b16 %v81
    %v146 = vunpack.c.l.b16 %v82
    %v147 = vpack.c.b16 %v146, %v145
    %vm148 = vcmask 130048
    %v150 = vsel %vm148, %v147, 0
    %152 = vmatpush.bf16.msra.mxu0 0
    %153 = vmatpush.bf16.msra.mxu0 0
    %154 = vmatpush.bf16.msra.mxu0 0
    %155 = vmatpush.bf16.msra.mxu0 0
    %156 = vmatpush.bf16.msra.mxu0 0
    %157 = vmatpush.bf16.msra.mxu0 0
    %158 = vmatpush.bf16.msra.mxu0 0
    %159 = vmatpush.bf16.msra.mxu0 %v141
    %160 = vmatmul.bf16.gmra.mxu0 %v150
    %v161 = vpop.f32.mrf.mxu0
    %v162 = vadd.f32 0.0, %v161
    %v163 = vpop.f32.mrf.mxu0
    %v164 = vadd.f32 0.0, %v163
    %165 = vdwg.mxu0
    %v168 = vunpack.c.l.b16 %v83
    %v169 = vunpack.c.l.b16 %v84
    %v170 = vpack.c.b16 %v169, %v168
    %vm171 = vcmask 64512
    %v173 = vsel %vm171, %v170, 0
    %vm175 = vcmask 1043456
    %v177 = vsel %vm175, %v142, 0
    %179 = vmatpush.bf16.msra.mxu0 0
    %180 = vmatpush.bf16.msra.mxu0 0
    %181 = vmatpush.bf16.msra.mxu0 0
    %182 = vmatpush.bf16.msra.mxu0 0
    %183 = vmatpush.bf16.msra.mxu0 0
    %184 = vmatpush.bf16.msra.mxu0 0
    %185 = vmatpush.bf16.msra.mxu0 0
    %186 = vmatpush.bf16.msra.mxu0 %v177
    %187 = vmatmul.bf16.gmra.mxu0 %v173
    %v188 = vpop.f32.mrf.mxu0
    %v189 = vadd.f32 0.0, %v188
    %v190 = vpop.f32.mrf.mxu0
    %v191 = vadd.f32 0.0, %v190
    %192 = vdwg.mxu0
    %v193 = vsub.f32 %v162, %v189
    %v194 = vsub.f32 %v164, %v191
    %v195 = vsub.f32 %v85, %v139
    %v196 = vsub.f32 %v86, %v139
    %v197 = vpack.c.bf16 %v194, %v193
    %v198 = vpack.c.bf16 %v196, %v195
    %v231 = vunpack.c.l.b16 %v88
    %v232 = vunpack.c.l.b16 %v89
    %v233 = vunpack.c.l.b16 %v90
    %v234 = vunpack.c.l.b16 %v91
    %v235 = vunpack.c.l.b16 %v92
    %v236 = vunpack.c.l.b16 %v93
    %v237 = vunpack.c.l.b16 %v94
    %v238 = vunpack.c.l.b16 %v95
    %v239 = vunpack.c.l.b16 %v96
    %v240 = vunpack.c.l.b16 %v97
    %v241 = vunpack.c.l.b16 %v98
    %v242 = vunpack.c.l.b16 %v99
    %v243 = vunpack.c.l.b16 %v100
    %v244 = vunpack.c.l.b16 %v101
    %v245 = vunpack.c.l.b16 %v102
    %v246 = vunpack.c.l.b16 %v103
    %v247 = vunpack.c.l.b16 %v104
    %v248 = vunpack.c.l.b16 %v105
    %v249 = vunpack.c.l.b16 %v106
    %v250 = vunpack.c.l.b16 %v107
    %v251 = vunpack.c.l.b16 %v108
    %v252 = vunpack.c.l.b16 %v109
    %v253 = vunpack.c.l.b16 %v110
    %v254 = vunpack.c.l.b16 %v111
    %v255 = vunpack.c.l.b16 %v112
    %v256 = vunpack.c.l.b16 %v113
    %v257 = vunpack.c.l.b16 %v114
    %v258 = vunpack.c.l.b16 %v115
    %v259 = vunpack.c.l.b16 %v116
    %v260 = vunpack.c.l.b16 %v117
    %v261 = vunpack.c.l.b16 %v118
    %v262 = vunpack.c.l.b16 %v119
    %v263 = vpack.c.b16 %v232, %v231
    %v264 = vpack.c.b16 %v234, %v233
    %v265 = vpack.c.b16 %v236, %v235
    %v266 = vpack.c.b16 %v238, %v237
    %v267 = vpack.c.b16 %v240, %v239
    %v268 = vpack.c.b16 %v242, %v241
    %v269 = vpack.c.b16 %v244, %v243
    %v270 = vpack.c.b16 %v246, %v245
    %v271 = vpack.c.b16 %v248, %v247
    %v272 = vpack.c.b16 %v250, %v249
    %v273 = vpack.c.b16 %v252, %v251
    %v274 = vpack.c.b16 %v254, %v253
    %v275 = vpack.c.b16 %v256, %v255
    %v276 = vpack.c.b16 %v258, %v257
    %v277 = vpack.c.b16 %v260, %v259
    %v278 = vpack.c.b16 %v262, %v261
    %295 = vmatpush.bf16.msra.mxu0 %v270
    %296 = vmatpush.bf16.msra.mxu0 %v269
    %297 = vmatpush.bf16.msra.mxu0 %v268
    %298 = vmatpush.bf16.msra.mxu0 %v267
    %299 = vmatpush.bf16.msra.mxu0 %v266
    %300 = vmatpush.bf16.msra.mxu0 %v265
    %301 = vmatpush.bf16.msra.mxu0 %v264
    %302 = vmatpush.bf16.msra.mxu0 %v263
    %303 = vmatmul.bf16.gmra.mxu0 %v197
    %v304 = vpop.f32.mrf.mxu0
    %v305 = vadd.f32 %v140, %v304
    %v306 = vpop.f32.mrf.mxu0
    %v307 = vadd.f32 %v140, %v306
    %308 = vdwg.mxu0
    %309 = vmatpush.bf16.msra.mxu0 %v278
    %310 = vmatpush.bf16.msra.mxu0 %v277
    %311 = vmatpush.bf16.msra.mxu0 %v276
    %312 = vmatpush.bf16.msra.mxu0 %v275
    %313 = vmatpush.bf16.msra.mxu0 %v274
    %314 = vmatpush.bf16.msra.mxu0 %v273
    %315 = vmatpush.bf16.msra.mxu0 %v272
    %316 = vmatpush.bf16.msra.mxu0 %v271
    %317 = vmatmul.bf16.gmra.mxu0 %v198
    %v318 = vpop.f32.mrf.mxu0
    %v319 = vadd.f32 %v305, %v318
    %v320 = vpop.f32.mrf.mxu0
    %v321 = vadd.f32 %v307, %v320
    %322 = vdwg.mxu0
    %v323 = vtanh.pop %v319
    %v324 = vtanh.pop %v321
    %vm325 = vcmp.lt.f32.partialorder %v137, 1.0
    %vm326 = vcmp.lt.f32.partialorder %v138, 1.0
    %v327 = vsel %vm325, 1, 0
    %v328 = vsel %vm326, 1, 0
    %329 = vset.pattern.permute.xlu0 0
    %330 = vperm.xlu0 %329, %v327
    %v331 = vpop.permute.xlu0 %330
    %332 = vset.pattern.permute.xlu0 0
    %333 = vperm.xlu0 %332, %v328
    %v334 = vpop.permute.xlu0 %333
    %vm335 = vcmp.eq.s32.totalorder %v331, 1
    %vm336 = vcmp.eq.s32.totalorder %v334, 1
    %v337 = vsel %vm335, %v85, %v323
    %v338 = vsel %vm336, %v86, %v324
    %v339 = vmax.f32 %v337, 0.0
    %v340 = vmax.f32 %v338, 0.0
    %v357 = vunpack.c.l.b16 %v120
    %v358 = vunpack.c.l.b16 %v121
    %v359 = vunpack.c.l.b16 %v122
    %v360 = vunpack.c.l.b16 %v123
    %v361 = vunpack.c.l.b16 %v124
    %v362 = vunpack.c.l.b16 %v125
    %v363 = vunpack.c.l.b16 %v126
    %v364 = vunpack.c.l.b16 %v127
    %v365 = vunpack.c.l.b16 %v128
    %v366 = vunpack.c.l.b16 %v129
    %v367 = vunpack.c.l.b16 %v130
    %v368 = vunpack.c.l.b16 %v131
    %v369 = vunpack.c.l.b16 %v132
    %v370 = vunpack.c.l.b16 %v133
    %v371 = vunpack.c.l.b16 %v134
    %v372 = vunpack.c.l.b16 %v135
    %v373 = vpack.c.b16 %v358, %v357
    %v374 = vpack.c.b16 %v360, %v359
    %v375 = vpack.c.b16 %v362, %v361
    %v376 = vpack.c.b16 %v364, %v363
    %v377 = vpack.c.b16 %v366, %v365
    %v378 = vpack.c.b16 %v368, %v367
    %v379 = vpack.c.b16 %v370, %v369
    %v380 = vpack.c.b16 %v372, %v371
    %389 = vmatpush.bf16.msra.mxu0 %v380
    %390 = vmatpush.bf16.msra.mxu0 %v379
    %391 = vmatpush.bf16.msra.mxu0 %v378
    %392 = vmatpush.bf16.msra.mxu0 %v377
    %393 = vmatpush.bf16.msra.mxu0 %v376
    %394 = vmatpush.bf16.msra.mxu0 %v375
    %395 = vmatpush.bf16.msra.mxu0 %v374
    %396 = vmatpush.bf16.msra.mxu0 %v373
    %397 = vmatmul.bf16.gmra.mxu0 %v142
    %v398 = vpop.f32.mrf.mxu0
    %v399 = vadd.f32 0.0, %v398
    %v400 = vpop.f32.mrf.mxu0
    %401 = vdwg.mxu0
    %v402 = vpack.c.bf16 %v340, %v339
    %v403 = vpack.c.bf16 %v399, %v399
    %404 = vmatpush.bf16.msra.mxu0 0
    %405 = vmatpush.bf16.msra.mxu0 0
    %406 = vmatpush.bf16.msra.mxu0 0
    %407 = vmatpush.bf16.msra.mxu0 0
    %408 = vmatpush.bf16.msra.mxu0 0
    %409 = vmatpush.bf16.msra.mxu0 0
    %410 = vmatpush.bf16.msra.mxu0 0
    %411 = vmatpush.bf16.msra.mxu0 %v402
    %412 = vmatmul.bf16.gmra.mxu0 %v150
    %v413 = vpop.f32.mrf.mxu0
    %v414 = vadd.f32 0.0, %v413
    %v415 = vpop.f32.mrf.mxu0
    %v416 = vadd.f32 0.0, %v415
    %417 = vdwg.mxu0
    %v419 = vsel %vm175, %v403, 0
    %421 = vmatpush.bf16.msra.mxu0 0
    %422 = vmatpush.bf16.msra.mxu0 0
    %423 = vmatpush.bf16.msra.mxu0 0
    %424 = vmatpush.bf16.msra.mxu0 0
    %425 = vmatpush.bf16.msra.mxu0 0
    %426 = vmatpush.bf16.msra.mxu0 0
    %427 = vmatpush.bf16.msra.mxu0 0
    %428 = vmatpush.bf16.msra.mxu0 %v419
    %429 = vmatmul.bf16.gmra.mxu0 %v173
    %v430 = vpop.f32.mrf.mxu0
    %v431 = vadd.f32 0.0, %v430
    %v432 = vpop.f32.mrf.mxu0
    %v433 = vadd.f32 0.0, %v432
    %434 = vdwg.mxu0
    %v435 = vsub.f32 %v414, %v431
    %v436 = vsub.f32 %v416, %v433
    %v437 = vsub.f32 %v339, %v139
    %v438 = vsub.f32 %v340, %v139
    %v439 = vpack.c.bf16 %v436, %v435
    %v440 = vpack.c.bf16 %v438, %v437
    %441 = vmatpush.bf16.msra.mxu0 %v270
    %442 = vmatpush.bf16.msra.mxu0 %v269
    %443 = vmatpush.bf16.msra.mxu0 %v268
    %444 = vmatpush.bf16.msra.mxu0 %v267
    %445 = vmatpush.bf16.msra.mxu0 %v266
    %446 = vmatpush.bf16.msra.mxu0 %v265
    %447 = vmatpush.bf16.msra.mxu0 %v264
    %448 = vmatpush.bf16.msra.mxu0 %v263
    %449 = vmatmul.bf16.gmra.mxu0 %v439
    %v450 = vpop.f32.mrf.mxu0
    %v451 = vadd.f32 %v140, %v450
    %v452 = vpop.f32.mrf.mxu0
    %v453 = vadd.f32 %v140, %v452
    %454 = vdwg.mxu0
    %455 = vmatpush.bf16.msra.mxu0 %v278
    %456 = vmatpush.bf16.msra.mxu0 %v277
    %457 = vmatpush.bf16.msra.mxu0 %v276
    %458 = vmatpush.bf16.msra.mxu0 %v275
    %459 = vmatpush.bf16.msra.mxu0 %v274
    %460 = vmatpush.bf16.msra.mxu0 %v273
    %461 = vmatpush.bf16.msra.mxu0 %v272
    %462 = vmatpush.bf16.msra.mxu0 %v271
    %463 = vmatmul.bf16.gmra.mxu0 %v440
    %v464 = vpop.f32.mrf.mxu0
    %v465 = vadd.f32 %v451, %v464
    %v466 = vpop.f32.mrf.mxu0
    %v467 = vadd.f32 %v453, %v466
    %468 = vdwg.mxu0
    %v469 = vtanh.pop %v465
    %v470 = vtanh.pop %v467
    %vm471 = vcmp.lt.f32.partialorder %v137, 2.0
    %vm472 = vcmp.lt.f32.partialorder %v138, 2.0
    %v473 = vsel %vm471, 1, 0
    %v474 = vsel %vm472, 1, 0
    %475 = vset.pattern.permute.xlu0 0
    %476 = vperm.xlu0 %475, %v473
    %v477 = vpop.permute.xlu0 %476
    %478 = vset.pattern.permute.xlu0 0
    %479 = vperm.xlu0 %478, %v474
    %v480 = vpop.permute.xlu0 %479
    %vm481 = vcmp.eq.s32.totalorder %v477, 1
    %vm482 = vcmp.eq.s32.totalorder %v480, 1
    %v483 = vsel %vm481, %v339, %v469
    %v484 = vsel %vm482, %v340, %v470
    %v485 = vmax.f32 %v483, 0.0
    %v486 = vmax.f32 %v484, 0.0
    %487 = vmatpush.bf16.msra.mxu0 %v380
    %488 = vmatpush.bf16.msra.mxu0 %v379
    %489 = vmatpush.bf16.msra.mxu0 %v378
    %490 = vmatpush.bf16.msra.mxu0 %v377
    %491 = vmatpush.bf16.msra.mxu0 %v376
    %492 = vmatpush.bf16.msra.mxu0 %v375
    %493 = vmatpush.bf16.msra.mxu0 %v374
    %494 = vmatpush.bf16.msra.mxu0 %v373
    %495 = vmatmul.bf16.gmra.mxu0 %v403
    %v496 = vpop.f32.mrf.mxu0
    %v497 = vadd.f32 0.0, %v496
    %v498 = vpop.f32.mrf.mxu0
    %499 = vdwg.mxu0
    %v500 = vpack.c.bf16 %v486, %v485
    %v501 = vpack.c.bf16 %v497, %v497
    %502 = vmatpush.bf16.msra.mxu0 0
    %503 = vmatpush.bf16.msra.mxu0 0
    %504 = vmatpush.bf16.msra.mxu0 0
    %505 = vmatpush.bf16.msra.mxu0 0
    %506 = vmatpush.bf16.msra.mxu0 0
    %507 = vmatpush.bf16.msra.mxu0 0
    %508 = vmatpush.bf16.msra.mxu0 0
    %509 = vmatpush.bf16.msra.mxu0 %v500
    %510 = vmatmul.bf16.gmra.mxu0 %v150
    %v511 = vpop.f32.mrf.mxu0
    %v512 = vadd.f32 0.0, %v511
    %v513 = vpop.f32.mrf.mxu0
    %v514 = vadd.f32 0.0, %v513
    %515 = vdwg.mxu0
    %v517 = vsel %vm175, %v501, 0
    %519 = vmatpush.bf16.msra.mxu0 0
    %520 = vmatpush.bf16.msra.mxu0 0
    %521 = vmatpush.bf16.msra.mxu0 0
    %522 = vmatpush.bf16.msra.mxu0 0
    %523 = vmatpush.bf16.msra.mxu0 0
    %524 = vmatpush.bf16.msra.mxu0 0
    %525 = vmatpush.bf16.msra.mxu0 0
    %526 = vmatpush.bf16.msra.mxu0 %v517
    %527 = vmatmul.bf16.gmra.mxu0 %v173
    %v528 = vpop.f32.mrf.mxu0
    %v529 = vadd.f32 0.0, %v528
    %v530 = vpop.f32.mrf.mxu0
    %v531 = vadd.f32 0.0, %v530
    %532 = vdwg.mxu0
    %v533 = vsub.f32 %v512, %v529
    %v534 = vsub.f32 %v514, %v531
    %v535 = vsub.f32 %v485, %v139
    %v536 = vsub.f32 %v486, %v139
    %v537 = vpack.c.bf16 %v534, %v533
    %v538 = vpack.c.bf16 %v536, %v535
    %539 = vmatpush.bf16.msra.mxu0 %v270
    %540 = vmatpush.bf16.msra.mxu0 %v269
    %541 = vmatpush.bf16.msra.mxu0 %v268
    %542 = vmatpush.bf16.msra.mxu0 %v267
    %543 = vmatpush.bf16.msra.mxu0 %v266
    %544 = vmatpush.bf16.msra.mxu0 %v265
    %545 = vmatpush.bf16.msra.mxu0 %v264
    %546 = vmatpush.bf16.msra.mxu0 %v263
    %547 = vmatmul.bf16.gmra.mxu0 %v537
    %v548 = vpop.f32.mrf.mxu0
    %v549 = vadd.f32 %v140, %v548
    %v550 = vpop.f32.mrf.mxu0
    %v551 = vadd.f32 %v140, %v550
    %552 = vdwg.mxu0
    %553 = vmatpush.bf16.msra.mxu0 %v278
    %554 = vmatpush.bf16.msra.mxu0 %v277
    %555 = vmatpush.bf16.msra.mxu0 %v276
    %556 = vmatpush.bf16.msra.mxu0 %v275
    %557 = vmatpush.bf16.msra.mxu0 %v274
    %558 = vmatpush.bf16.msra.mxu0 %v273
    %559 = vmatpush.bf16.msra.mxu0 %v272
    %560 = vmatpush.bf16.msra.mxu0 %v271
    %561 = vmatmul.bf16.gmra.mxu0 %v538
    %v562 = vpop.f32.mrf.mxu0
    %v563 = vadd.f32 %v549, %v562
    %v564 = vpop.f32.mrf.mxu0
    %v565 = vadd.f32 %v551, %v564
    %566 = vdwg.mxu0
    %v567 = vtanh.pop %v563
    %v568 = vtanh.pop %v565
    %vm569 = vcmp.lt.f32.partialorder %v137, 3.0
    %vm570 = vcmp.lt.f32.partialorder %v138, 3.0
    %v571 = vsel %vm569, 1, 0
    %v572 = vsel %vm570, 1, 0
    %573 = vset.pattern.permute.xlu0 0
    %574 = vperm.xlu0 %573, %v571
    %v575 = vpop.permute.xlu0 %574
    %576 = vset.pattern.permute.xlu0 0
    %577 = vperm.xlu0 %576, %v572
    %v578 = vpop.permute.xlu0 %577
    %vm579 = vcmp.eq.s32.totalorder %v575, 1
    %vm580 = vcmp.eq.s32.totalorder %v578, 1
    %v581 = vsel %vm579, %v485, %v567
    %v582 = vsel %vm580, %v486, %v568
    %v583 = vld [vmem:[%s8] sm:$0xf]
    %v585 = vsel %vm148, %v583, 0
    %587 = vmatpush.msra.mxu0 0.0
    %588 = vmatpush.msra.mxu0 0.0
    %589 = vmatpush.msra.mxu0 0.0
    %590 = vmatpush.msra.mxu0 0.0
    %591 = vmatpush.msra.mxu0 0.0
    %592 = vmatpush.msra.mxu0 0.0
    %593 = vmatpush.msra.mxu0 0.0
    %594 = vmatpush.msra.mxu0 0.0
    %595 = vmatpush.msra.mxu0 0.0
    %596 = vmatpush.msra.mxu0 0.0
    %597 = vmatpush.msra.mxu0 0.0
    %598 = vmatpush.msra.mxu0 0.0
    %599 = vmatpush.msra.mxu0 0.0
    %600 = vmatpush.msra.mxu0 0.0
    %601 = vmatpush.msra.mxu0 %v582
    %602 = vmatpush.msra.mxu0 %v581
    %603 = vmatmul.f32.gmra.mxu0 %v585
    %v604 = vpop.f32.mrf.mxu0
    %v605 = vadd.f32 0.0, %v604
    %606 = vdwg.mxu0
    %607 = vst [vmem:[#allocation8] sm:$0xf] %v605
    // Predicated region
    $region50: #{tpu_custom_call.1} parent=1 // pred_check
      _
    $region51: #{tpu_custom_call.1} parent=1 // pred_check_branch
      %609 = sbr.rel (0) target = $region53
    $region52: #{tpu_custom_call.1} parent=1 // pred_region
      %611 = vsyncadd [#allocation4], 0
      %s613 = sshll.u32 [#allocation8], 4
      %s614 = int_to_ptr.vmem [resolvable:$true] %s613
      %s615 = sshll.u32 %s9, 4
      %s616 = int_to_ptr.hbm [resolvable:$true] %s615
      %618 = dma.vmem_to_hbm [thread:$0]  %s614, 64, %s616, [#allocation4]
    $region53: #{tpu_custom_call.1} parent=1 // pred_fallthru
      _
    // Predicated region
    $region54: #{tpu_custom_call.1} parent=1 // pred_check
      _
    $region55: #{tpu_custom_call.1} parent=1 // pred_check_branch
      %620 = sbr.rel (0) target = $region57
    $region56: #{tpu_custom_call.1} parent=1 // pred_region
      %622 = dma.done [#allocation4], 64
    $region57: #{tpu_custom_call.1} parent=1 // pred_fallthru
      _
    %623 = vsyncpa [#allocation3], 1
    %624 = vsyncpa [#allocation6], 1
    %625 = vsyncpa [#allocation4], 1

</llo_original>
